<compile_context>
chip_gen: v5e
topology: v5e:2x2
jax: 0.10.0
libtpu: 0.0.40
codegen_flags: <defaults>
</compile_context>

<pallas_src>
import math
import functools

import jax
import jax.numpy as jnp
from jax import lax
from jax.experimental import pallas as pl
from jax.experimental.pallas import tpu as pltpu


_ONEHOT_MAX_VOCAB = 2048   # one-hot/MXU path only for tiny vocab
_GATHER_WINDOW = 16        # outstanding row DMAs per block on the gather path


# ---------------------------------------------------------------------------
# Path 1 (primary): HBM row-gather DMA kernel -- any vocab size.
# ---------------------------------------------------------------------------
def _gather_kernel(idx_ref, table_ref, out_ref, buf_ref, sem, *, scale, tb, window):
    # idx_ref   : SMEM (n_pad,) int32   -- scalar-prefetched token indices
    # table_ref : HBM  (V, Dp)  float   -- full table (memory_space=pl.ANY)
    # out_ref   : VMEM (tb, Dp) float   -- output tile for this grid step
    # buf_ref   : VMEM (tb, Dp) float   -- row-gather landing buffer
    # sem       : DMA semaphore shared by all row copies of this block
    base = pl.program_id(0) * tb

    def row_copy(dst_row, tok):
        return pltpu.make_async_copy(
            table_ref.at[pl.ds(tok, 1), :],
            buf_ref.at[pl.ds(dst_row, 1), :],
            sem)

    def issue(i, carry):
        row_copy(i, idx_ref[base + i]).start()
        return carry

    def wait_and_refill(i, carry):
        # Keep `window` row DMAs in flight: issue row i+window (scalar read
        # from SMEM happens before the wait), then wait for row i.  All rows
        # have identical byte counts, so per-row waits on the shared
        # semaphore are well defined.
        @pl.when(i + window < tb)
        def _():
            row_copy(i + window, idx_ref[base + i + window]).start()
        row_copy(i, 0).wait()
        return carry

    lax.fori_loop(0, min(window, tb), issue, 0)
    lax.fori_loop(0, tb, wait_and_refill, 0)

    # Single block-wide scale once every row has landed.
    out_ref[...] = (buf_ref[...] * scale).astype(out_ref.dtype)


# ---------------------------------------------------------------------------
# Path 2 (small vocab): resident-table one-hot MXU gather.
# ---------------------------------------------------------------------------
def _onehot_kernel(idx_ref, table_ref, out_ref, *, scale):
    # idx_ref   : VMEM (tb, 1) int32
    # table_ref : VMEM (V, Dp) float    -- full table, resident
    # out_ref   : VMEM (tb, Dp) float
    V = table_ref.shape[0]
    ids = idx_ref[...]                                     # (tb, 1)
    iota = lax.broadcasted_iota(jnp.int32, (1, V), 1)      # (1, V) -- broadcast in compare
    one_hot = (ids == iota).astype(table_ref.dtype)        # (tb, V)
    acc = jnp.dot(one_hot, table_ref[...],
                  preferred_element_type=jnp.float32)      # (tb, Dp) f32
    out_ref[...] = (acc * scale).astype(out_ref.dtype)


def _vmem_budget_bytes():
    """Generation-aware VMEM budget (per TensorCore)."""
    cap = 64 * 1024 * 1024            # conservative default (v7x: 64 MiB / TC)
    try:
        cap = int(pltpu.get_tpu_info().vmem_capacity_bytes)
    except Exception:
        pass
    # Leave headroom for Pallas-internal scratch, semaphores, double buffers.
    return int(cap * 6 // 10)


def embeddings_forward(x, table, d_model, *, tokens_per_block=256,
                       force_gather=False):
    """x: (B, S) integer indices; table: (vocab, d_model) -> (B, S, d_model)."""
    B, S = x.shape
    V, D = table.shape
    assert D == d_model

    dtype = table.dtype
    itemsize = jnp.dtype(dtype).itemsize
    scale = float(math.sqrt(d_model))
    n = B * S

    # Lane-dense output: pad d_model to a multiple of 128 so stores are
    # unmasked vst.  Real models already have D % 128 == 0 (no-op then).
    D_pad = max(128, pl.cdiv(D, 128) * 128)
    if D_pad != D:
        table = jnp.pad(table, ((0, 0), (0, D_pad - D)))

    # Clamp indices so the row DMA / one-hot can never index out of bounds.
    # (nn.Embedding raises on OOB; clamping is the safe in-kernel behavior.)
    idx = jnp.clip(x.reshape(n).astype(jnp.int32), 0, V - 1)

    # Token-block size: multiple of 8 (sublane), default 256, clamped to the
    # padded token count.
    tb = max(8, min(tokens_per_block, pl.cdiv(n, 8) * 8))
    tb = (tb // 8) * 8
    n_pad = pl.cdiv(n, tb) * tb
    if n_pad != n:
        idx = jnp.pad(idx, (0, n_pad - n))   # padded rows sliced off below
    grid = (n_pad // tb,)

    budget = _vmem_budget_bytes()

    # Honest VMEM estimate for the resident one-hot path, including the
    # one-hot / iota / f32-accumulator intermediates the old version omitted.
    mxu_vmem = (2 * V * D_pad * itemsize        # resident table (double-buffered)
                + 2 * tb * D_pad * itemsize     # output tile (double-buffered)
                + 2 * tb * 4                    # index tile
                + tb * V * itemsize             # one-hot
                + V * 4                         # (1, V) iota
                + tb * D_pad * 4)               # f32 accumulator

    use_onehot = ((not force_gather)
                  and V <= _ONEHOT_MAX_VOCAB
                  and mxu_vmem <= budget)

    if use_onehot:
        idx2d = idx.reshape(n_pad, 1)
        vmem_limit = int(min(max(2 * mxu_vmem, 16 * 1024 * 1024), budget))
        cost = pl.CostEstimate(
            flops=2 * n_pad * V * D_pad,
            transcendentals=0,
            bytes_accessed=(V * D_pad + n_pad * D_pad) * itemsize + n_pad * 4)

        out_flat = pl.pallas_call(
            functools.partial(_onehot_kernel, scale=scale),
            out_shape=jax.ShapeDtypeStruct((n_pad, D_pad), dtype),
            grid_spec=pltpu.PrefetchScalarGridSpec(
                num_scalar_prefetch=0,
                grid=grid,
                in_specs=[
                    pl.BlockSpec((tb, 1), lambda i: (i, 0)),       # index tile
                    pl.BlockSpec((V, D_pad), lambda i: (0, 0)),    # resident table
                ],
                out_specs=pl.BlockSpec((tb, D_pad), lambda i: (i, 0)),
            ),
            compiler_params=pltpu.CompilerParams(
                dimension_semantics=("parallel",),
                vmem_limit_bytes=vmem_limit,
            ),
            cost_estimate=cost,
        )(idx2d, table)
    else:
        window = min(_GATHER_WINDOW, tb)
        gather_vmem = 3 * tb * D_pad * itemsize + tb * 4
        vmem_limit = int(min(max(2 * gather_vmem, 16 * 1024 * 1024), budget))
        cost = pl.CostEstimate(
            flops=n_pad * D_pad,
            transcendentals=0,
            bytes_accessed=2 * n_pad * D_pad * itemsize + n_pad * 4)

        out_flat = pl.pallas_call(
            functools.partial(_gather_kernel, scale=scale, tb=tb, window=window),
            out_shape=jax.ShapeDtypeStruct((n_pad, D_pad), dtype),
            grid_spec=pltpu.PrefetchScalarGridSpec(
                num_scalar_prefetch=1,                       # idx -> SMEM
                grid=grid,
                in_specs=[pl.BlockSpec(memory_space=pl.ANY)],  # table stays in HBM
                out_specs=pl.BlockSpec((tb, D_pad), lambda i, idx: (i, 0)),
                scratch_shapes=[
                    pltpu.VMEM((tb, D_pad), dtype),          # gather landing buffer
                    pltpu.SemaphoreType.DMA,                 # shared row-DMA semaphore
                ],
            ),
            compiler_params=pltpu.CompilerParams(
                dimension_semantics=("parallel",),
                vmem_limit_bytes=vmem_limit,
            ),
            cost_estimate=cost,
        )(idx, table)

    return out_flat[:n, :D].reshape(B, S, D)


if __name__ == "__main__":
    d_model = 32
    vocab = 50
    B, S = 2, 8

    key = jax.random.PRNGKey(0)
    k_w, k_x = jax.random.split(key)

    # nn.Embedding default init is N(0, 1).
    table = jax.random.normal(k_w, (vocab, d_model), dtype=jnp.float32)
    x = jax.random.randint(k_x, (B, S), 0, vocab, dtype=jnp.int32)

    ref = jnp.take(table, x, axis=0) * math.sqrt(d_model)

    # Small-vocab (resident one-hot MXU) path.
    out_onehot = jax.block_until_ready(embeddings_forward(x, table, d_model))
    assert out_onehot.shape == (B, S, d_model)
    assert jnp.allclose(out_onehot, ref, atol=1e-5, rtol=1e-5)

    # HBM row-gather DMA path (forced so both paths are exercised/validated).
    out_gather = jax.block_until_ready(
        embeddings_forward(x, table, d_model, force_gather=True))
    assert out_gather.shape == (B, S, d_model)
    assert jnp.allclose(out_gather, ref, atol=1e-5, rtol=1e-5)

    print("KERNEL_OK")
</pallas_src>

<mosaic_0001>
module attributes {stable_mosaic.version = 11 : i64} {
  func.func @_onehot_kernel(%arg0: i32, %arg1: memref<16x1xi32, #tpu.memory_space<vmem>>, %arg2: memref<50x128xf32, #tpu.memory_space<vmem>>, %arg3: memref<16x128xf32, #tpu.memory_space<vmem>>) attributes {dimension_semantics = [#tpu.dimension_semantics<parallel>], iteration_bounds = array<i64: 1>, scalar_prefetch = 0 : i64, scratch_operands = 0 : i64, tpu.core_type = #tpu.core_type<tc>, window_params = [{transform_indices = @transform_0, window_bounds = array<i64: 16, 1>}, {pipeline_mode = #tpu.pipeline_mode<synchronous>, transform_indices = @transform_1, window_bounds = array<i64: 50, 128>}, {transform_indices = @transform_2, window_bounds = array<i64: 16, 128>}]} {
    %c0 = arith.constant 0 : index
    %c0_0 = arith.constant 0 : index
    %0 = vector.load %arg1[%c0, %c0_0] : memref<16x1xi32, #tpu.memory_space<vmem>>, vector<16x1xi32>
    %1 = tpu.iota {dimensions = array<i32: 1>} : vector<1x50xi32>
    %2 = vector.broadcast %0 : vector<16x1xi32> to vector<16x50xi32>
    %3 = vector.broadcast %1 : vector<1x50xi32> to vector<16x50xi32>
    %4 = arith.cmpi eq, %2, %3 : vector<16x50xi32>
    %5 = arith.extui %4 : vector<16x50xi1> to vector<16x50xi32>
    %6 = arith.sitofp %5 : vector<16x50xi32> to vector<16x50xf32>
    %c0_1 = arith.constant 0 : index
    %c0_2 = arith.constant 0 : index
    %7 = vector.load %arg2[%c0_1, %c0_2] : memref<50x128xf32, #tpu.memory_space<vmem>>, vector<50x128xf32>
    %cst = arith.constant dense<0.000000e+00> : vector<16x128xf32>
    %8 = tpu.matmul %6, %7, %cst {dimension_numbers = #tpu.dot_dimension_numbers<[1], [0], [0], [1], [0, 0, 1, 1], [], []>} : vector<16x50xf32>, vector<50x128xf32>, vector<16x128xf32> -> vector<16x128xf32>
    %cst_3 = arith.constant 5.65685415 : f32
    %9 = vector.broadcast %cst_3 : f32 to vector<16x128xf32>
    %10 = arith.mulf %8, %9 : vector<16x128xf32>
    %c0_4 = arith.constant 0 : index
    %c0_5 = arith.constant 0 : index
    %11 = vector.load %arg3[%c0_4, %c0_5] : memref<16x128xf32, #tpu.memory_space<vmem>>, vector<16x128xf32>
    tpu.vector_store %arg3[%c0_4, %c0_5], %10 {strides = array<i32>} : memref<16x128xf32, #tpu.memory_space<vmem>>, vector<16x128xf32>,
    return
  }
  func.func @transform_0(%arg0: i32) -> (i32, i32) {
    %c0_i32 = arith.constant 0 : i32
    %c0_i32_0 = arith.constant 0 : i32
    return %arg0, %c0_i32 : i32, i32
  }
  func.func @transform_1(%arg0: i32) -> (i32, i32) {
    %c0_i32 = arith.constant 0 : i32
    %c0_i32_0 = arith.constant 0 : i32
    %c0_i32_1 = arith.constant 0 : i32
    return %c0_i32, %c0_i32_0 : i32, i32
  }
  func.func @transform_2(%arg0: i32) -> (i32, i32) {
    %c0_i32 = arith.constant 0 : i32
    %c0_i32_0 = arith.constant 0 : i32
    return %arg0, %c0_i32 : i32, i32
  }
}

</mosaic_0001>

<llo_original>
// kernel: tpu_custom_call.1
$region0: #{tpu_custom_call.1}
  #allocation0 [shape = 'u32[]', space=smem, size = 0x4, offset = 0x4, fixed_abs, tag = 'smem constant byte address 0x4 - core index']
  #allocation1 [shape = 'u32[72,128]{1,0:T(1,128)}', space=vmem, size = 0x9000, scoped, tag = 'internal scratch']
  %s0 = inlined_call_operand.vmem [shape: s32[16,1], index: 0, kind: input, shape index: {}]
  %s1 = inlined_call_operand.hbm [shape: f32[50,128], index: 1, kind: input, shape index: {}]
  %s2 = inlined_call_operand.hbm [shape: f32[16,128], index: 2, kind: output, shape index: {}]
  %s3 = sld [smem:[#allocation0]]
  $region22: #{tpu_custom_call.1} parent=0
    _
  %s5 = ssub.s32 1, %s3
  %s6 = scalar_select 0, %s5, %s3
  $region1: #{tpu_custom_call.1} parent=0
    #allocation2 [shape = 'u8[28672]{0}', space=vmem, size = 0x7000, scoped, tag = 'input window, operand 1, single buffered']
    #allocation3 [shape = 's32[1]{0}', space=sflag, size = 0x4, scoped, tag = 'scoped memory for tpu_custom_call.1']
    #allocation4 [shape = 's32[1]{0}', space=sflag, size = 0x4, scoped, tag = 'scoped memory for tpu_custom_call.1']
    #allocation5 [shape = 'u8[8192]{0}', space=vmem, size = 0x2000, scoped, tag = 'output window, operand 0, single buffered']
    %7 = vsyncpa [#allocation3], 0
    %8 = vsyncpa [#allocation4], 0
    // Predicated region
    $region2: #{tpu_custom_call.1} parent=1 // pred_check
      _
    $region3: #{tpu_custom_call.1} parent=1 // pred_check_branch
      %10 = sbr.rel (0) target = $region5
    $region4: #{tpu_custom_call.1} parent=1 // pred_region
      _
    $region5: #{tpu_custom_call.1} parent=1 // pred_fallthru
      _
    // Predicated region
    $region6: #{tpu_custom_call.1} parent=1 // pred_check
      _
    $region7: #{tpu_custom_call.1} parent=1 // pred_check_branch
      %12 = sbr.rel (0) target = $region9
    $region8: #{tpu_custom_call.1} parent=1 // pred_region
      %14 = vsyncadd [#allocation3], 0
      %s15 = sshll.u32 %s1, 4
      %s16 = int_to_ptr.hbm [resolvable:$true] %s15
      %s17 = sshll.u32 [#allocation2], 4
      %s18 = int_to_ptr.vmem [resolvable:$true] %s17
      %23 = dma.hbm_to_vmem [thread:$0]  %s16, 896, %s18, [#allocation3], 128, 128, 8
    $region9: #{tpu_custom_call.1} parent=1 // pred_fallthru
      _
    // Predicated region
    $region10: #{tpu_custom_call.1} parent=1 // pred_check
      _
    $region11: #{tpu_custom_call.1} parent=1 // pred_check_branch
      %25 = sbr.rel (0) target = $region13
    $region12: #{tpu_custom_call.1} parent=1 // pred_region
      %27 = dma.done [#allocation3], 896
    $region13: #{tpu_custom_call.1} parent=1 // pred_fallthru
      _
    %v28 = vld [vmem:[%s0] sm:$0xff]
    %v29 = vld [vmem:[%s0 + $0x8] sm:$0xff]
    %v30 = vlaneseq
    %v31 = vand.u32 %v30, 127
    %32 = vset.pattern.permute.xlu0 0
    %33 = vperm.xlu0 %32, %v28
    %v34 = vpop.permute.xlu0 %33
    %35 = vset.pattern.permute.xlu0 0
    %36 = vperm.xlu0 %35, %v29
    %v37 = vpop.permute.xlu0 %36
    %vm38 = vcmp.eq.s32.totalorder %v34, %v31
    %vm39 = vcmp.eq.s32.totalorder %v37, %v31
    %v40 = vsel %vm38, 1, 0
    %v41 = vsel %vm39, 1, 0
    %v42 = vcvt.s32.f32 %v40
    %v43 = vcvt.s32.f32 %v41
    %v44 = vld [vmem:[#allocation2] sm:$0xff]
    %v45 = vld [vmem:[#allocation2 + $0x8] sm:$0xff]
    %v46 = vld [vmem:[#allocation2 + $0x10] sm:$0xff]
    %v47 = vld [vmem:[#allocation2 + $0x18] sm:$0xff]
    %v48 = vld [vmem:[#allocation2 + $0x20] sm:$0xff]
    %v49 = vld [vmem:[#allocation2 + $0x28] sm:$0xff]
    %v50 = vld [vmem:[#allocation2 + $0x30] sm:$0x3]
    %vm51 = vcmask 408576
    %v53 = vsel %vm51, %v42, 0
    %v56 = vsel %vm51, %v43, 0
    %vm58 = vcmask 1041408
    %v60 = vsel %vm58, %v50, 0
    %62 = vmatpush.msra.mxu0 0.0
    %63 = vmatpush.msra.mxu0 0.0
    %64 = vmatpush.msra.mxu0 0.0
    %65 = vmatpush.msra.mxu0 0.0
    %66 = vmatpush.msra.mxu0 0.0
    %67 = vmatpush.msra.mxu0 0.0
    %68 = vmatpush.msra.mxu0 0.0
    %69 = vmatpush.msra.mxu0 0.0
    %70 = vmatpush.msra.mxu0 0.0
    %71 = vmatpush.msra.mxu0 %v60
    %72 = vmatpush.msra.mxu0 %v49
    %73 = vmatpush.msra.mxu0 %v48
    %74 = vmatpush.msra.mxu0 %v47
    %75 = vmatpush.msra.mxu0 %v46
    %76 = vmatpush.msra.mxu0 %v45
    %77 = vmatpush.msra.mxu0 %v44
    %78 = vmatmul.f32.gmra.mxu0 %v53
    %v79 = vpop.f32.mrf.mxu0
    %v80 = vadd.f32 0.0, %v79
    %81 = vmatmul.f32.gmra.mxu0 %v56
    %v82 = vpop.f32.mrf.mxu0
    %v83 = vadd.f32 0.0, %v82
    %84 = vdwg.mxu0
    %v85 = vmul.f32 %v80, 5.656854
    %v86 = vmul.f32 %v83, 5.656854
    %87 = vst [vmem:[#allocation5] sm:$0xff] %v85
    %88 = vst [vmem:[#allocation5 + $0x8] sm:$0xff] %v86
    // Predicated region
    $region14: #{tpu_custom_call.1} parent=1 // pred_check
      _
    $region15: #{tpu_custom_call.1} parent=1 // pred_check_branch
      %90 = sbr.rel (0) target = $region17
    $region16: #{tpu_custom_call.1} parent=1 // pred_region
      %92 = vsyncadd [#allocation4], 0
      %s93 = sshll.u32 [#allocation5], 4
      %s94 = int_to_ptr.vmem [resolvable:$true] %s93
      %s95 = sshll.u32 %s2, 4
      %s96 = int_to_ptr.hbm [resolvable:$true] %s95
      %101 = dma.vmem_to_hbm [thread:$0]  %s94, 256, %s96, [#allocation4], 128, 128, 8
    $region17: #{tpu_custom_call.1} parent=1 // pred_fallthru
      _
    // Predicated region
    $region18: #{tpu_custom_call.1} parent=1 // pred_check
      _
    $region19: #{tpu_custom_call.1} parent=1 // pred_check_branch
      %103 = sbr.rel (0) target = $region21
    $region20: #{tpu_custom_call.1} parent=1 // pred_region
      %105 = dma.done [#allocation4], 256
    $region21: #{tpu_custom_call.1} parent=1 // pred_fallthru
      _
    %106 = vsyncpa [#allocation3], 1
    %107 = vsyncpa [#allocation4], 1

</llo_original>
